<compile_context>
chip_gen: v6e
topology: v6e:2x2x1
jax: 0.10.0
libtpu: 0.0.40
codegen_flags: <defaults>
</compile_context>

<pallas_src>
import functools

import jax
import jax.numpy as jnp
from jax.experimental import pallas as pl
from jax.experimental.pallas import tpu as pltpu


def _round_up(n, m):
    return ((n + m - 1) // m) * m


# ----------------------------- Pallas kernel ------------------------------ #
def _fused_relukan_kernel(x_ref, noise_ref, *refs, r, order, n_layers):
    """All Bayes_ReLUKAN layers fused; activations stay in VMEM as values.

    refs = [E, NE1, NE2, plo, phi, w, b] * n_layers + [o_ref]
      E    : (in_pad, MP)    0/1 expansion matrix, column m = j*I + i
      NE1/2: (noise_pad, MP) noise-expansion matrices with std folded in
      plo/phi : (1, MP)      flattened (zero-padded) phase params
      w    : (MP, OP)        flattened conv kernel (zero-padded rows/cols)
      b    : (1, OP)
    Everything is 128-lane padded; padded lanes stay exactly zero through the
    whole chain, so no masking / slicing is needed anywhere.
    """
    o_ref = refs[-1]
    p_refs = refs[:-1]

    h = x_ref[...]            # (tb, in_pad0), f32, lane-dense
    noise = noise_ref[...]    # (tb, noise_pad), f32, lane-dense

    for l in range(n_layers):
        (e_ref, ne1_ref, ne2_ref, plo_ref, phi_ref,
         w_ref, b_ref) = p_refs[7 * l:7 * l + 7]

        # (tb, in_pad) x (in_pad, MP) -> (tb, MP): x broadcast over grid pts.
        x_exp = jnp.dot(h, e_ref[...], preferred_element_type=jnp.float32)
        # std * noise, expanded over grid points (std folded into NE at init).
        m1 = jnp.dot(noise, ne1_ref[...], preferred_element_type=jnp.float32)
        m2 = jnp.dot(noise, ne2_ref[...], preferred_element_type=jnp.float32)

        x1 = jnp.maximum(x_exp - plo_ref[...] - m1, 0.0)
        x2 = jnp.maximum(phi_ref[...] + m2 - x_exp, 0.0)

        f = x1 * x2 * r
        if order != 1:                   # chained multiplies, no integer_pow
            base = f
            for _ in range(int(order) - 1):
                f = f * base
        f = f * f                        # reference: x = x**order; x = x*x

        # Fully-covering conv == flat matmul over the (g+k)*I feature buffer.
        h = jnp.dot(f, w_ref[...],
                    preferred_element_type=jnp.float32) + b_ref[...]

    o_ref[...] = h                       # lane-dense (tb, OP_last) store


# --------------------------- parameter creation ---------------------------- #
def init_layer_params(key, input_size, g, k, output_size, *, in_pad,
                      noise_pad, noise_off1, noise_off2,
                      imin=0.0, imax=1.0):
    G = g + k
    M = input_size * G
    MP = _round_up(M, 128)
    OP = _round_up(output_size, 128)

    row = (imax - imin) * jnp.arange(-k, g, dtype=jnp.float32) / g + imin
    phase_low = jnp.tile(row[None, :], (input_size, 1))            # (I, G)
    phase_high = phase_low + (k + 1) / g * (imax - imin)           # (I, G)

    k1, k2, k3, k4 = jax.random.split(key, 4)
    plo_log_var = -9.0 + 0.1 * jax.random.normal(k1, (input_size, G),
                                                 dtype=jnp.float32)
    phi_log_var = -9.0 + 0.1 * jax.random.normal(k2, (input_size, G),
                                                 dtype=jnp.float32)

    # Flatten with m = j*I + i (grid-major, input-minor), zero-pad to MP lanes.
    flat = lambda a: a.T.reshape(1, M)
    pad_row = lambda a: jnp.pad(a, ((0, 0), (0, MP - M)))
    plo = pad_row(flat(phase_low))
    phi = pad_row(flat(phase_high))

    # 0/1 expansion matrix: Exp[i, j*I + i] = 1; zero-padded rows/cols.
    Exp = jnp.tile(jnp.eye(input_size, dtype=jnp.float32), (1, G))  # (I, M)
    E = jnp.zeros((in_pad, MP), jnp.float32).at[:input_size, :M].set(Exp)

    # Noise-expansion matrices with std = exp(0.5*log_var) folded in:
    # (noise @ NE1)[b, j*I+i] = std_low[i, j] * n1[b, i].
    sl_flat = flat(jnp.exp(0.5 * plo_log_var))                      # (1, M)
    sh_flat = flat(jnp.exp(0.5 * phi_log_var))
    NE1 = jnp.zeros((noise_pad, MP), jnp.float32).at[
        noise_off1:noise_off1 + input_size, :M].set(Exp * sl_flat)
    NE2 = jnp.zeros((noise_pad, MP), jnp.float32).at[
        noise_off2:noise_off2 + input_size, :M].set(Exp * sh_flat)

    # TODO(synk): MNFConv2d weight-sampling flow / kl_div not provided;
    # deterministic synthetic conv weights generated directly in the
    # m = j*I + i ordering, zero-padded to 128-lane output width.
    w = 0.1 * jax.random.normal(k3, (M, output_size), dtype=jnp.float32)
    b = 0.01 * jax.random.normal(k4, (output_size,), dtype=jnp.float32)
    w = jnp.pad(w, ((0, MP - M), (0, OP - output_size)))
    b = jnp.pad(b, (0, OP - output_size)).reshape(1, OP)

    return dict(E=E, NE1=NE1, NE2=NE2, plo=plo, phi=phi, w=w, b=b,
                input_size=input_size, output_size=output_size,
                in_pad=in_pad, m_pad=MP, o_pad=OP,
                noise_off1=noise_off1, noise_off2=noise_off2)


def init_model_params(key, width, g, k, imin=0.0, imax=1.0):
    total_noise = sum(2 * w_in for w_in in width[:-1])
    noise_pad = max(128, _round_up(total_noise, 128))
    params = []
    off = 0
    in_pad = _round_up(width[0], 128)
    for i in range(len(width) - 1):
        key, sub = jax.random.split(key)
        off1, off2 = off, off + width[i]
        off += 2 * width[i]
        p = init_layer_params(sub, width[i], g, k, width[i + 1],
                              in_pad=in_pad, noise_pad=noise_pad,
                              noise_off1=off1, noise_off2=off2,
                              imin=imin, imax=imax)
        params.append(p)
        in_pad = p["o_pad"]
    return params, noise_pad


# ------------------------------ model forward ------------------------------ #
def _choose_batch_tile(B):
    """Sublane-aligned batch tile; big tiles to amortize grid overhead, but
    >= 2 grid steps when the batch allows it (v7x: two TensorCores)."""
    b8 = _round_up(B, 8)
    if b8 <= 16:
        return b8, b8
    if b8 <= 2048:
        tb = _round_up((b8 + 1) // 2, 8)
        return tb, _round_up(b8, tb)
    tb = 1024
    return tb, _round_up(b8, tb)


def bayes_relukan_forward(params_list, noise_pad, x, key, *, g, k, order=1,
                          imin=0.0, imax=1.0):
    """x: (B, width[0]) f32 -> (B, width[-1], 1)   (multi_dim=False path)."""
    if order == 1:
        r = 4.0 * g * g / ((k + 1) ** 2 * (imax - imin) ** 2)
    else:
        r = 2.0 * g / ((k + 1) * (imax - imin))

    B, I0 = x.shape
    assert I0 == params_list[0]["input_size"]
    ip0 = params_list[0]["in_pad"]
    o_last = params_list[-1]["output_size"]
    op_last = params_list[-1]["o_pad"]

    tb, b_pad = _choose_batch_tile(B)

    x_pad = jnp.zeros((b_pad, ip0), jnp.float32).at[:B, :I0].set(
        x.astype(jnp.float32))

    # One Gaussian draw per (batch, input) per bound per layer (torch
    # randn_like(x) with multi_dim=False), packed into a single lane-dense
    # (B, noise_pad) block; disjoint lane ranges keep each layer/bound noise
    # independent.
    noise_parts = []
    for p in params_list:
        key, k1, k2 = jax.random.split(key, 3)
        noise_parts.append(
            jax.random.normal(k1, (B, p["input_size"]), jnp.float32))
        noise_parts.append(
            jax.random.normal(k2, (B, p["input_size"]), jnp.float32))
    noise = jnp.concatenate(noise_parts, axis=1)
    noise = jnp.pad(noise, ((0, b_pad - B), (0, noise_pad - noise.shape[1])))

    kernel = functools.partial(_fused_relukan_kernel, r=float(r),
                               order=int(order), n_layers=len(params_list))

    in_specs = [
        pl.BlockSpec((tb, ip0), lambda bi: (bi, 0)),
        pl.BlockSpec((tb, noise_pad), lambda bi: (bi, 0)),
    ]
    flat_args = [x_pad, noise]
    flops = 0
    param_bytes = 0
    for p in params_list:
        for name in ("E", "NE1", "NE2", "plo", "phi", "w", "b"):
            arr = p[name]
            # Constant index map -> stays VMEM-resident across batch tiles.
            # (If widths grow: add pipeline_mode=pl.Buffered(1) to single-
            # buffer these and store w in bf16.)
            in_specs.append(pl.BlockSpec(arr.shape, lambda bi: (0, 0)))
            flat_args.append(arr)
            param_bytes += int(arr.size) * 4
        mp, op, inp = p["m_pad"], p["o_pad"], p["in_pad"]
        flops += 2 * b_pad * (inp * mp + 2 * noise_pad * mp + mp * op)

    cost = pl.CostEstimate(
        flops=int(flops), transcendentals=0,
        bytes_accessed=int(param_bytes
                           + 4 * b_pad * (ip0 + noise_pad + op_last)))

    out = pl.pallas_call(
        kernel,
        out_shape=jax.ShapeDtypeStruct((b_pad, op_last), jnp.float32),
        grid=(b_pad // tb,),
        in_specs=in_specs,
        out_specs=pl.BlockSpec((tb, op_last), lambda bi: (bi, 0)),
        compiler_params=pltpu.CompilerParams(
            dimension_semantics=("parallel",)),
        cost_estimate=cost,
    )(*flat_args)

    # Torch returns (len(x), output_size, 1) when multi_dim=False.
    return out[:B, :o_last][:, :, None]


# ----------------------------------- main ---------------------------------- #
if __name__ == "__main__":
    width = [4, 8, 3]     # Bayes_ReLUKAN(width=[4, 8, 3], grid=5, k=3)
    g, k, order = 5, 3, 1
    batch = 2

    root = jax.random.PRNGKey(0)
    k_params, k_x, k_noise = jax.random.split(root, 3)

    params, noise_pad = init_model_params(k_params, width, g, k)
    x = jax.random.uniform(k_x, (batch, width[0]), dtype=jnp.float32)  # [0,1)

    out = bayes_relukan_forward(params, noise_pad, x, k_noise,
                                g=g, k=k, order=order)
    out = jax.block_until_ready(out)

    assert out.shape == (batch, width[-1], 1), out.shape
    assert out.dtype == jnp.float32
    assert bool(jnp.all(jnp.isfinite(out)))
    print("KERNEL_OK")
</pallas_src>

<mosaic_0001>
module attributes {stable_mosaic.version = 11 : i64} {
  func.func @_fused_relukan_kernel(%arg0: i32, %arg1: memref<8x128xf32, #tpu.memory_space<vmem>>, %arg2: memref<8x128xf32, #tpu.memory_space<vmem>>, %arg3: memref<128x128xf32, #tpu.memory_space<vmem>>, %arg4: memref<128x128xf32, #tpu.memory_space<vmem>>, %arg5: memref<128x128xf32, #tpu.memory_space<vmem>>, %arg6: memref<1x128xf32, #tpu.memory_space<vmem>>, %arg7: memref<1x128xf32, #tpu.memory_space<vmem>>, %arg8: memref<128x128xf32, #tpu.memory_space<vmem>>, %arg9: memref<1x128xf32, #tpu.memory_space<vmem>>, %arg10: memref<128x128xf32, #tpu.memory_space<vmem>>, %arg11: memref<128x128xf32, #tpu.memory_space<vmem>>, %arg12: memref<128x128xf32, #tpu.memory_space<vmem>>, %arg13: memref<1x128xf32, #tpu.memory_space<vmem>>, %arg14: memref<1x128xf32, #tpu.memory_space<vmem>>, %arg15: memref<128x128xf32, #tpu.memory_space<vmem>>, %arg16: memref<1x128xf32, #tpu.memory_space<vmem>>, %arg17: memref<8x128xf32, #tpu.memory_space<vmem>>) attributes {dimension_semantics = [#tpu.dimension_semantics<parallel>], iteration_bounds = array<i64: 1>, scalar_prefetch = 0 : i64, scratch_operands = 0 : i64, tpu.core_type = #tpu.core_type<tc>, window_params = [{transform_indices = @transform_0, window_bounds = array<i64: 8, 128>}, {transform_indices = @transform_1, window_bounds = array<i64: 8, 128>}, {pipeline_mode = #tpu.pipeline_mode<synchronous>, transform_indices = @transform_2, window_bounds = array<i64: 128, 128>}, {pipeline_mode = #tpu.pipeline_mode<synchronous>, transform_indices = @transform_3, window_bounds = array<i64: 128, 128>}, {pipeline_mode = #tpu.pipeline_mode<synchronous>, transform_indices = @transform_4, window_bounds = array<i64: 128, 128>}, {pipeline_mode = #tpu.pipeline_mode<synchronous>, transform_indices = @transform_5, window_bounds = array<i64: 1, 128>}, {pipeline_mode = #tpu.pipeline_mode<synchronous>, transform_indices = @transform_6, window_bounds = array<i64: 1, 128>}, {pipeline_mode = #tpu.pipeline_mode<synchronous>, transform_indices = @transform_7, window_bounds = array<i64: 128, 128>}, {pipeline_mode = #tpu.pipeline_mode<synchronous>, transform_indices = @transform_8, window_bounds = array<i64: 1, 128>}, {pipeline_mode = #tpu.pipeline_mode<synchronous>, transform_indices = @transform_9, window_bounds = array<i64: 128, 128>}, {pipeline_mode = #tpu.pipeline_mode<synchronous>, transform_indices = @transform_10, window_bounds = array<i64: 128, 128>}, {pipeline_mode = #tpu.pipeline_mode<synchronous>, transform_indices = @transform_11, window_bounds = array<i64: 128, 128>}, {pipeline_mode = #tpu.pipeline_mode<synchronous>, transform_indices = @transform_12, window_bounds = array<i64: 1, 128>}, {pipeline_mode = #tpu.pipeline_mode<synchronous>, transform_indices = @transform_13, window_bounds = array<i64: 1, 128>}, {pipeline_mode = #tpu.pipeline_mode<synchronous>, transform_indices = @transform_14, window_bounds = array<i64: 128, 128>}, {pipeline_mode = #tpu.pipeline_mode<synchronous>, transform_indices = @transform_15, window_bounds = array<i64: 1, 128>}, {transform_indices = @transform_16, window_bounds = array<i64: 8, 128>}]} {
    %c0 = arith.constant 0 : index
    %c0_0 = arith.constant 0 : index
    %0 = vector.load %arg1[%c0, %c0_0] : memref<8x128xf32, #tpu.memory_space<vmem>>, vector<8x128xf32>
    %c0_1 = arith.constant 0 : index
    %c0_2 = arith.constant 0 : index
    %1 = vector.load %arg2[%c0_1, %c0_2] : memref<8x128xf32, #tpu.memory_space<vmem>>, vector<8x128xf32>
    %c0_3 = arith.constant 0 : index
    %c0_4 = arith.constant 0 : index
    %2 = vector.load %arg3[%c0_3, %c0_4] : memref<128x128xf32, #tpu.memory_space<vmem>>, vector<128x128xf32>
    %cst = arith.constant dense<0.000000e+00> : vector<8x128xf32>
    %3 = tpu.matmul %0, %2, %cst {dimension_numbers = #tpu.dot_dimension_numbers<[1], [0], [0], [1], [0, 0, 1, 1], [], []>} : vector<8x128xf32>, vector<128x128xf32>, vector<8x128xf32> -> vector<8x128xf32>
    %c0_5 = arith.constant 0 : index
    %c0_6 = arith.constant 0 : index
    %4 = vector.load %arg4[%c0_5, %c0_6] : memref<128x128xf32, #tpu.memory_space<vmem>>, vector<128x128xf32>
    %cst_7 = arith.constant dense<0.000000e+00> : vector<8x128xf32>
    %5 = tpu.matmul %1, %4, %cst_7 {dimension_numbers = #tpu.dot_dimension_numbers<[1], [0], [0], [1], [0, 0, 1, 1], [], []>} : vector<8x128xf32>, vector<128x128xf32>, vector<8x128xf32> -> vector<8x128xf32>
    %c0_8 = arith.constant 0 : index
    %c0_9 = arith.constant 0 : index
    %6 = vector.load %arg5[%c0_8, %c0_9] : memref<128x128xf32, #tpu.memory_space<vmem>>, vector<128x128xf32>
    %cst_10 = arith.constant dense<0.000000e+00> : vector<8x128xf32>
    %7 = tpu.matmul %1, %6, %cst_10 {dimension_numbers = #tpu.dot_dimension_numbers<[1], [0], [0], [1], [0, 0, 1, 1], [], []>} : vector<8x128xf32>, vector<128x128xf32>, vector<8x128xf32> -> vector<8x128xf32>
    %c0_11 = arith.constant 0 : index
    %c0_12 = arith.constant 0 : index
    %8 = vector.load %arg6[%c0_11, %c0_12] : memref<1x128xf32, #tpu.memory_space<vmem>>, vector<1x128xf32>
    %9 = vector.broadcast %8 : vector<1x128xf32> to vector<8x128xf32>
    %10 = arith.subf %3, %9 : vector<8x128xf32>
    %11 = arith.subf %10, %5 : vector<8x128xf32>
    %cst_13 = arith.constant 0.000000e+00 : f32
    %12 = vector.broadcast %cst_13 : f32 to vector<8x128xf32>
    %13 = arith.maximumf %11, %12 : vector<8x128xf32>
    %c0_14 = arith.constant 0 : index
    %c0_15 = arith.constant 0 : index
    %14 = vector.load %arg7[%c0_14, %c0_15] : memref<1x128xf32, #tpu.memory_space<vmem>>, vector<1x128xf32>
    %15 = vector.broadcast %14 : vector<1x128xf32> to vector<8x128xf32>
    %16 = arith.addf %15, %7 : vector<8x128xf32>
    %17 = arith.subf %16, %3 : vector<8x128xf32>
    %cst_16 = arith.constant 0.000000e+00 : f32
    %18 = vector.broadcast %cst_16 : f32 to vector<8x128xf32>
    %19 = arith.maximumf %17, %18 : vector<8x128xf32>
    %20 = arith.mulf %13, %19 : vector<8x128xf32>
    %cst_17 = arith.constant 6.250000e+00 : f32
    %21 = vector.broadcast %cst_17 : f32 to vector<8x128xf32>
    %22 = arith.mulf %20, %21 : vector<8x128xf32>
    %23 = arith.mulf %22, %22 : vector<8x128xf32>
    %c0_18 = arith.constant 0 : index
    %c0_19 = arith.constant 0 : index
    %24 = vector.load %arg8[%c0_18, %c0_19] : memref<128x128xf32, #tpu.memory_space<vmem>>, vector<128x128xf32>
    %cst_20 = arith.constant dense<0.000000e+00> : vector<8x128xf32>
    %25 = tpu.matmul %23, %24, %cst_20 {dimension_numbers = #tpu.dot_dimension_numbers<[1], [0], [0], [1], [0, 0, 1, 1], [], []>} : vector<8x128xf32>, vector<128x128xf32>, vector<8x128xf32> -> vector<8x128xf32>
    %c0_21 = arith.constant 0 : index
    %c0_22 = arith.constant 0 : index
    %26 = vector.load %arg9[%c0_21, %c0_22] : memref<1x128xf32, #tpu.memory_space<vmem>>, vector<1x128xf32>
    %27 = vector.broadcast %26 : vector<1x128xf32> to vector<8x128xf32>
    %28 = arith.addf %25, %27 : vector<8x128xf32>
    %c0_23 = arith.constant 0 : index
    %c0_24 = arith.constant 0 : index
    %29 = vector.load %arg10[%c0_23, %c0_24] : memref<128x128xf32, #tpu.memory_space<vmem>>, vector<128x128xf32>
    %cst_25 = arith.constant dense<0.000000e+00> : vector<8x128xf32>
    %30 = tpu.matmul %28, %29, %cst_25 {dimension_numbers = #tpu.dot_dimension_numbers<[1], [0], [0], [1], [0, 0, 1, 1], [], []>} : vector<8x128xf32>, vector<128x128xf32>, vector<8x128xf32> -> vector<8x128xf32>
    %c0_26 = arith.constant 0 : index
    %c0_27 = arith.constant 0 : index
    %31 = vector.load %arg11[%c0_26, %c0_27] : memref<128x128xf32, #tpu.memory_space<vmem>>, vector<128x128xf32>
    %cst_28 = arith.constant dense<0.000000e+00> : vector<8x128xf32>
    %32 = tpu.matmul %1, %31, %cst_28 {dimension_numbers = #tpu.dot_dimension_numbers<[1], [0], [0], [1], [0, 0, 1, 1], [], []>} : vector<8x128xf32>, vector<128x128xf32>, vector<8x128xf32> -> vector<8x128xf32>
    %c0_29 = arith.constant 0 : index
    %c0_30 = arith.constant 0 : index
    %33 = vector.load %arg12[%c0_29, %c0_30] : memref<128x128xf32, #tpu.memory_space<vmem>>, vector<128x128xf32>
    %cst_31 = arith.constant dense<0.000000e+00> : vector<8x128xf32>
    %34 = tpu.matmul %1, %33, %cst_31 {dimension_numbers = #tpu.dot_dimension_numbers<[1], [0], [0], [1], [0, 0, 1, 1], [], []>} : vector<8x128xf32>, vector<128x128xf32>, vector<8x128xf32> -> vector<8x128xf32>
    %c0_32 = arith.constant 0 : index
    %c0_33 = arith.constant 0 : index
    %35 = vector.load %arg13[%c0_32, %c0_33] : memref<1x128xf32, #tpu.memory_space<vmem>>, vector<1x128xf32>
    %36 = vector.broadcast %35 : vector<1x128xf32> to vector<8x128xf32>
    %37 = arith.subf %30, %36 : vector<8x128xf32>
    %38 = arith.subf %37, %32 : vector<8x128xf32>
    %cst_34 = arith.constant 0.000000e+00 : f32
    %39 = vector.broadcast %cst_34 : f32 to vector<8x128xf32>
    %40 = arith.maximumf %38, %39 : vector<8x128xf32>
    %c0_35 = arith.constant 0 : index
    %c0_36 = arith.constant 0 : index
    %41 = vector.load %arg14[%c0_35, %c0_36] : memref<1x128xf32, #tpu.memory_space<vmem>>, vector<1x128xf32>
    %42 = vector.broadcast %41 : vector<1x128xf32> to vector<8x128xf32>
    %43 = arith.addf %42, %34 : vector<8x128xf32>
    %44 = arith.subf %43, %30 : vector<8x128xf32>
    %cst_37 = arith.constant 0.000000e+00 : f32
    %45 = vector.broadcast %cst_37 : f32 to vector<8x128xf32>
    %46 = arith.maximumf %44, %45 : vector<8x128xf32>
    %47 = arith.mulf %40, %46 : vector<8x128xf32>
    %cst_38 = arith.constant 6.250000e+00 : f32
    %48 = vector.broadcast %cst_38 : f32 to vector<8x128xf32>
    %49 = arith.mulf %47, %48 : vector<8x128xf32>
    %50 = arith.mulf %49, %49 : vector<8x128xf32>
    %c0_39 = arith.constant 0 : index
    %c0_40 = arith.constant 0 : index
    %51 = vector.load %arg15[%c0_39, %c0_40] : memref<128x128xf32, #tpu.memory_space<vmem>>, vector<128x128xf32>
    %cst_41 = arith.constant dense<0.000000e+00> : vector<8x128xf32>
    %52 = tpu.matmul %50, %51, %cst_41 {dimension_numbers = #tpu.dot_dimension_numbers<[1], [0], [0], [1], [0, 0, 1, 1], [], []>} : vector<8x128xf32>, vector<128x128xf32>, vector<8x128xf32> -> vector<8x128xf32>
    %c0_42 = arith.constant 0 : index
    %c0_43 = arith.constant 0 : index
    %53 = vector.load %arg16[%c0_42, %c0_43] : memref<1x128xf32, #tpu.memory_space<vmem>>, vector<1x128xf32>
    %54 = vector.broadcast %53 : vector<1x128xf32> to vector<8x128xf32>
    %55 = arith.addf %52, %54 : vector<8x128xf32>
    %c0_44 = arith.constant 0 : index
    %c0_45 = arith.constant 0 : index
    %56 = vector.load %arg17[%c0_44, %c0_45] : memref<8x128xf32, #tpu.memory_space<vmem>>, vector<8x128xf32>
    tpu.vector_store %arg17[%c0_44, %c0_45], %55 {strides = array<i32>} : memref<8x128xf32, #tpu.memory_space<vmem>>, vector<8x128xf32>,
    return
  }
  func.func @transform_0(%arg0: i32) -> (i32, i32) {
    %c0_i32 = arith.constant 0 : i32
    %c0_i32_0 = arith.constant 0 : i32
    return %arg0, %c0_i32 : i32, i32
  }
  func.func @transform_1(%arg0: i32) -> (i32, i32) {
    %c0_i32 = arith.constant 0 : i32
    %c0_i32_0 = arith.constant 0 : i32
    return %arg0, %c0_i32 : i32, i32
  }
  func.func @transform_2(%arg0: i32) -> (i32, i32) {
    %c0_i32 = arith.constant 0 : i32
    %c0_i32_0 = arith.constant 0 : i32
    %c0_i32_1 = arith.constant 0 : i32
    return %c0_i32, %c0_i32_0 : i32, i32
  }
  func.func @transform_3(%arg0: i32) -> (i32, i32) {
    %c0_i32 = arith.constant 0 : i32
    %c0_i32_0 = arith.constant 0 : i32
    %c0_i32_1 = arith.constant 0 : i32
    return %c0_i32, %c0_i32_0 : i32, i32
  }
  func.func @transform_4(%arg0: i32) -> (i32, i32) {
    %c0_i32 = arith.constant 0 : i32
    %c0_i32_0 = arith.constant 0 : i32
    %c0_i32_1 = arith.constant 0 : i32
    return %c0_i32, %c0_i32_0 : i32, i32
  }
  func.func @transform_5(%arg0: i32) -> (i32, i32) {
    %c0_i32 = arith.constant 0 : i32
    %c0_i32_0 = arith.constant 0 : i32
    %c0_i32_1 = arith.constant 0 : i32
    return %c0_i32, %c0_i32_0 : i32, i32
  }
  func.func @transform_6(%arg0: i32) -> (i32, i32) {
    %c0_i32 = arith.constant 0 : i32
    %c0_i32_0 = arith.constant 0 : i32
    %c0_i32_1 = arith.constant 0 : i32
    return %c0_i32, %c0_i32_0 : i32, i32
  }
  func.func @transform_7(%arg0: i32) -> (i32, i32) {
    %c0_i32 = arith.constant 0 : i32
    %c0_i32_0 = arith.constant 0 : i32
    %c0_i32_1 = arith.constant 0 : i32
    return %c0_i32, %c0_i32_0 : i32, i32
  }
  func.func @transform_8(%arg0: i32) -> (i32, i32) {
    %c0_i32 = arith.constant 0 : i32
    %c0_i32_0 = arith.constant 0 : i32
    %c0_i32_1 = arith.constant 0 : i32
    return %c0_i32, %c0_i32_0 : i32, i32
  }
  func.func @transform_9(%arg0: i32) -> (i32, i32) {
    %c0_i32 = arith.constant 0 : i32
    %c0_i32_0 = arith.constant 0 : i32
    %c0_i32_1 = arith.constant 0 : i32
    return %c0_i32, %c0_i32_0 : i32, i32
  }
  func.func @transform_10(%arg0: i32) -> (i32, i32) {
    %c0_i32 = arith.constant 0 : i32
    %c0_i32_0 = arith.constant 0 : i32
    %c0_i32_1 = arith.constant 0 : i32
    return %c0_i32, %c0_i32_0 : i32, i32
  }
  func.func @transform_11(%arg0: i32) -> (i32, i32) {
    %c0_i32 = arith.constant 0 : i32
    %c0_i32_0 = arith.constant 0 : i32
    %c0_i32_1 = arith.constant 0 : i32
    return %c0_i32, %c0_i32_0 : i32, i32
  }
  func.func @transform_12(%arg0: i32) -> (i32, i32) {
    %c0_i32 = arith.constant 0 : i32
    %c0_i32_0 = arith.constant 0 : i32
    %c0_i32_1 = arith.constant 0 : i32
    return %c0_i32, %c0_i32_0 : i32, i32
  }
  func.func @transform_13(%arg0: i32) -> (i32, i32) {
    %c0_i32 = arith.constant 0 : i32
    %c0_i32_0 = arith.constant 0 : i32
    %c0_i32_1 = arith.constant 0 : i32
    return %c0_i32, %c0_i32_0 : i32, i32
  }
  func.func @transform_14(%arg0: i32) -> (i32, i32) {
    %c0_i32 = arith.constant 0 : i32
    %c0_i32_0 = arith.constant 0 : i32
    %c0_i32_1 = arith.constant 0 : i32
    return %c0_i32, %c0_i32_0 : i32, i32
  }
  func.func @transform_15(%arg0: i32) -> (i32, i32) {
    %c0_i32 = arith.constant 0 : i32
    %c0_i32_0 = arith.constant 0 : i32
    %c0_i32_1 = arith.constant 0 : i32
    return %c0_i32, %c0_i32_0 : i32, i32
  }
  func.func @transform_16(%arg0: i32) -> (i32, i32) {
    %c0_i32 = arith.constant 0 : i32
    %c0_i32_0 = arith.constant 0 : i32
    return %arg0, %c0_i32 : i32, i32
  }
}

</mosaic_0001>

<llo_original>
// kernel: tpu_custom_call.1
$region0: #{tpu_custom_call.1}
  #allocation0 [shape = 'u32[]', space=smem, size = 0x4, offset = 0x4, fixed_abs, tag = 'smem constant byte address 0x4 - core index']
  #allocation1 [shape = 'u32[144,128]{1,0:T(1,128)}', space=vmem, size = 0x12000, scoped, tag = 'internal scratch']
  %s0 = inlined_call_operand.hbm [shape: f32[8,128], index: 0, kind: input, shape index: {}]
  %s1 = inlined_call_operand.hbm [shape: f32[8,128], index: 1, kind: input, shape index: {}]
  %s2 = inlined_call_operand.hbm [shape: f32[128,128], index: 2, kind: input, shape index: {}]
  %s3 = inlined_call_operand.hbm [shape: f32[128,128], index: 3, kind: input, shape index: {}]
  %s4 = inlined_call_operand.hbm [shape: f32[128,128], index: 4, kind: input, shape index: {}]
  %s5 = inlined_call_operand.vmem [shape: f32[1,128], index: 5, kind: input, shape index: {}]
  %s6 = inlined_call_operand.vmem [shape: f32[1,128], index: 6, kind: input, shape index: {}]
  %s7 = inlined_call_operand.hbm [shape: f32[128,128], index: 7, kind: input, shape index: {}]
  %s8 = inlined_call_operand.vmem [shape: f32[1,128], index: 8, kind: input, shape index: {}]
  %s9 = inlined_call_operand.hbm [shape: f32[128,128], index: 9, kind: input, shape index: {}]
  %s10 = inlined_call_operand.hbm [shape: f32[128,128], index: 10, kind: input, shape index: {}]
  %s11 = inlined_call_operand.hbm [shape: f32[128,128], index: 11, kind: input, shape index: {}]
  %s12 = inlined_call_operand.vmem [shape: f32[1,128], index: 12, kind: input, shape index: {}]
  %s13 = inlined_call_operand.vmem [shape: f32[1,128], index: 13, kind: input, shape index: {}]
  %s14 = inlined_call_operand.hbm [shape: f32[128,128], index: 14, kind: input, shape index: {}]
  %s15 = inlined_call_operand.vmem [shape: f32[1,128], index: 15, kind: input, shape index: {}]
  %s16 = inlined_call_operand.hbm [shape: f32[8,128], index: 16, kind: output, shape index: {}]
  %s17 = sld [smem:[#allocation0]]
  $region114: #{tpu_custom_call.1} parent=0
    _
  %s19 = ssub.s32 1, %s17
  %s20 = scalar_select 0, %s19, %s17
  $region1: #{tpu_custom_call.1} parent=0
    #allocation2 [shape = 'u8[4096]{0}', space=vmem, size = 0x1000, scoped, tag = 'input window, operand 0, single buffered']
    #allocation3 [shape = 's32[1]{0}', space=sflag, size = 0x4, scoped, tag = 'scoped memory for tpu_custom_call.1']
    #allocation4 [shape = 's32[1]{0}', space=sflag, size = 0x4, scoped, tag = 'scoped memory for tpu_custom_call.1']
    #allocation5 [shape = 'u8[4096]{0}', space=vmem, size = 0x1000, scoped, tag = 'input window, operand 1, single buffered']
    #allocation6 [shape = 's32[1]{0}', space=sflag, size = 0x4, scoped, tag = 'scoped memory for tpu_custom_call.1']
    #allocation7 [shape = 'u8[65536]{0}', space=vmem, size = 0x10000, scoped, tag = 'input window, operand 2, single buffered']
    #allocation8 [shape = 'u8[65536]{0}', space=vmem, size = 0x10000, scoped, tag = 'input window, operand 3, single buffered']
    #allocation9 [shape = 's32[1]{0}', space=sflag, size = 0x4, scoped, tag = 'scoped memory for tpu_custom_call.1']
    #allocation10 [shape = 'u8[65536]{0}', space=vmem, size = 0x10000, scoped, tag = 'input window, operand 4, single buffered']
    #allocation11 [shape = 'u8[65536]{0}', space=vmem, size = 0x10000, scoped, tag = 'input window, operand 7, single buffered']
    #allocation12 [shape = 's32[1]{0}', space=sflag, size = 0x4, scoped, tag = 'scoped memory for tpu_custom_call.1']
    #allocation13 [shape = 'u8[65536]{0}', space=vmem, size = 0x10000, scoped, tag = 'input window, operand 9, single buffered']
    #allocation14 [shape = 'u8[65536]{0}', space=vmem, size = 0x10000, scoped, tag = 'input window, operand 10, single buffered']
    #allocation15 [shape = 's32[1]{0}', space=sflag, size = 0x4, scoped, tag = 'scoped memory for tpu_custom_call.1']
    #allocation16 [shape = 'u8[65536]{0}', space=vmem, size = 0x10000, scoped, tag = 'input window, operand 11, single buffered']
    #allocation17 [shape = 'u8[65536]{0}', space=vmem, size = 0x10000, scoped, tag = 'input window, operand 14, single buffered']
    #allocation18 [shape = 's32[1]{0}', space=sflag, size = 0x4, scoped, tag = 'scoped memory for tpu_custom_call.1']
    #allocation19 [shape = 'u8[4096]{0}', space=vmem, size = 0x1000, scoped, tag = 'output window, operand 0, single buffered']
    %21 = vsyncpa [#allocation3], 0
    %22 = vsyncpa [#allocation6], 0
    %23 = vsyncpa [#allocation9], 0
    %24 = vsyncpa [#allocation12], 0
    %25 = vsyncpa [#allocation15], 0
    %26 = vsyncpa [#allocation18], 0
    %27 = vsyncpa [#allocation4], 0
    // Predicated region
    $region2: #{tpu_custom_call.1} parent=1 // pred_check
      _
    $region3: #{tpu_custom_call.1} parent=1 // pred_check_branch
      %29 = sbr.rel (0) target = $region5
    $region4: #{tpu_custom_call.1} parent=1 // pred_region
      %s31 = ssub.s32 128, 128
      %32 = vsyncadd [#allocation3], %s31
      %s34 = sshll.u32 [#allocation2], 4
      %s35 = int_to_ptr.vmem [resolvable:$true] %s34
      %37 = dma.hbm_to_vmem [thread:$0]  %s0, 128, %s35, [#allocation3]
    $region5: #{tpu_custom_call.1} parent=1 // pred_fallthru
      _
    // Predicated region
    $region6: #{tpu_custom_call.1} parent=1 // pred_check
      _
    $region7: #{tpu_custom_call.1} parent=1 // pred_check_branch
      %39 = sbr.rel (0) target = $region9
    $region8: #{tpu_custom_call.1} parent=1 // pred_region
      %s41 = ssub.s32 128, 128
      %42 = vsyncadd [#allocation6], %s41
      %s44 = sshll.u32 [#allocation5], 4
      %s45 = int_to_ptr.vmem [resolvable:$true] %s44
      %47 = dma.hbm_to_vmem [thread:$0]  %s1, 128, %s45, [#allocation6]
    $region9: #{tpu_custom_call.1} parent=1 // pred_fallthru
      _
    // Predicated region
    $region10: #{tpu_custom_call.1} parent=1 // pred_check
      _
    $region11: #{tpu_custom_call.1} parent=1 // pred_check_branch
      %49 = sbr.rel (0) target = $region13
    $region12: #{tpu_custom_call.1} parent=1 // pred_region
      %s51 = ssub.s32 2048, 2048
      %52 = vsyncadd [#allocation6], %s51
      %s53 = sshll.u32 [#allocation7], 4
      %s54 = int_to_ptr.vmem [resolvable:$true] %s53
      %59 = dma.hbm_to_vmem [thread:$0]  %s2, 2048, %s54, [#allocation6], 128, 128, 8
    $region13: #{tpu_custom_call.1} parent=1 // pred_fallthru
      _
    // Predicated region
    $region14: #{tpu_custom_call.1} parent=1 // pred_check
      _
    $region15: #{tpu_custom_call.1} parent=1 // pred_check_branch
      %61 = sbr.rel (0) target = $region17
    $region16: #{tpu_custom_call.1} parent=1 // pred_region
      %s63 = ssub.s32 2048, 2048
      %64 = vsyncadd [#allocation9], %s63
      %s65 = sshll.u32 [#allocation8], 4
      %s66 = int_to_ptr.vmem [resolvable:$true] %s65
      %71 = dma.hbm_to_vmem [thread:$0]  %s3, 2048, %s66, [#allocation9], 128, 128, 8
    $region17: #{tpu_custom_call.1} parent=1 // pred_fallthru
      _
    // Predicated region
    $region18: #{tpu_custom_call.1} parent=1 // pred_check
      _
    $region19: #{tpu_custom_call.1} parent=1 // pred_check_branch
      %73 = sbr.rel (0) target = $region21
    $region20: #{tpu_custom_call.1} parent=1 // pred_region
      %s75 = ssub.s32 2048, 2048
      %76 = vsyncadd [#allocation9], %s75
      %s77 = sshll.u32 [#allocation10], 4
      %s78 = int_to_ptr.vmem [resolvable:$true] %s77
      %83 = dma.hbm_to_vmem [thread:$0]  %s4, 2048, %s78, [#allocation9], 128, 128, 8
    $region21: #{tpu_custom_call.1} parent=1 // pred_fallthru
      _
    // Predicated region
    $region22: #{tpu_custom_call.1} parent=1 // pred_check
      _
    $region23: #{tpu_custom_call.1} parent=1 // pred_check_branch
      %85 = sbr.rel (0) target = $region25
    $region24: #{tpu_custom_call.1} parent=1 // pred_region
      _
    $region25: #{tpu_custom_call.1} parent=1 // pred_fallthru
      _
    // Predicated region
    $region26: #{tpu_custom_call.1} parent=1 // pred_check
      _
    $region27: #{tpu_custom_call.1} parent=1 // pred_check_branch
      %87 = sbr.rel (0) target = $region29
    $region28: #{tpu_custom_call.1} parent=1 // pred_region
      _
    $region29: #{tpu_custom_call.1} parent=1 // pred_fallthru
      _
    // Predicated region
    $region30: #{tpu_custom_call.1} parent=1 // pred_check
      _
    $region31: #{tpu_custom_call.1} parent=1 // pred_check_branch
      %89 = sbr.rel (0) target = $region33
    $region32: #{tpu_custom_call.1} parent=1 // pred_region
      %s91 = ssub.s32 2048, 2048
      %92 = vsyncadd [#allocation12], %s91
      %s93 = sshll.u32 [#allocation11], 4
      %s94 = int_to_ptr.vmem [resolvable:$true] %s93
      %99 = dma.hbm_to_vmem [thread:$0]  %s7, 2048, %s94, [#allocation12], 128, 128, 8
    $region33: #{tpu_custom_call.1} parent=1 // pred_fallthru
      _
    // Predicated region
    $region34: #{tpu_custom_call.1} parent=1 // pred_check
      _
    $region35: #{tpu_custom_call.1} parent=1 // pred_check_branch
      %101 = sbr.rel (0) target = $region37
    $region36: #{tpu_custom_call.1} parent=1 // pred_region
      _
    $region37: #{tpu_custom_call.1} parent=1 // pred_fallthru
      _
    // Predicated region
    $region38: #{tpu_custom_call.1} parent=1 // pred_check
      _
    $region39: #{tpu_custom_call.1} parent=1 // pred_check_branch
      %103 = sbr.rel (0) target = $region41
    $region40: #{tpu_custom_call.1} parent=1 // pred_region
      %s105 = ssub.s32 2048, 2048
      %106 = vsyncadd [#allocation12], %s105
      %s107 = sshll.u32 [#allocation13], 4
      %s108 = int_to_ptr.vmem [resolvable:$true] %s107
      %113 = dma.hbm_to_vmem [thread:$0]  %s9, 2048, %s108, [#allocation12], 128, 128, 8
    $region41: #{tpu_custom_call.1} parent=1 // pred_fallthru
      _
    // Predicated region
    $region42: #{tpu_custom_call.1} parent=1 // pred_check
      _
    $region43: #{tpu_custom_call.1} parent=1 // pred_check_branch
      %115 = sbr.rel (0) target = $region45
    $region44: #{tpu_custom_call.1} parent=1 // pred_region
      %s117 = ssub.s32 2048, 2048
      %118 = vsyncadd [#allocation15], %s117
      %s119 = sshll.u32 [#allocation14], 4
      %s120 = int_to_ptr.vmem [resolvable:$true] %s119
      %125 = dma.hbm_to_vmem [thread:$0]  %s10, 2048, %s120, [#allocation15], 128, 128, 8
    $region45: #{tpu_custom_call.1} parent=1 // pred_fallthru
      _
    // Predicated region
    $region46: #{tpu_custom_call.1} parent=1 // pred_check
      _
    $region47: #{tpu_custom_call.1} parent=1 // pred_check_branch
      %127 = sbr.rel (0) target = $region49
    $region48: #{tpu_custom_call.1} parent=1 // pred_region
      %s129 = ssub.s32 2048, 2048
      %130 = vsyncadd [#allocation15], %s129
      %s131 = sshll.u32 [#allocation16], 4
      %s132 = int_to_ptr.vmem [resolvable:$true] %s131
      %137 = dma.hbm_to_vmem [thread:$0]  %s11, 2048, %s132, [#allocation15], 128, 128, 8
    $region49: #{tpu_custom_call.1} parent=1 // pred_fallthru
      _
    // Predicated region
    $region50: #{tpu_custom_call.1} parent=1 // pred_check
      _
    $region51: #{tpu_custom_call.1} parent=1 // pred_check_branch
      %139 = sbr.rel (0) target = $region53
    $region52: #{tpu_custom_call.1} parent=1 // pred_region
      _
    $region53: #{tpu_custom_call.1} parent=1 // pred_fallthru
      _
    // Predicated region
    $region54: #{tpu_custom_call.1} parent=1 // pred_check
      _
    $region55: #{tpu_custom_call.1} parent=1 // pred_check_branch
      %141 = sbr.rel (0) target = $region57
    $region56: #{tpu_custom_call.1} parent=1 // pred_region
      _
    $region57: #{tpu_custom_call.1} parent=1 // pred_fallthru
      _
    // Predicated region
    $region58: #{tpu_custom_call.1} parent=1 // pred_check
      _
    $region59: #{tpu_custom_call.1} parent=1 // pred_check_branch
      %143 = sbr.rel (0) target = $region61
    $region60: #{tpu_custom_call.1} parent=1 // pred_region
      %s145 = ssub.s32 2048, 2048
      %146 = vsyncadd [#allocation18], %s145
      %s147 = sshll.u32 [#allocation17], 4
      %s148 = int_to_ptr.vmem [resolvable:$true] %s147
      %153 = dma.hbm_to_vmem [thread:$0]  %s14, 2048, %s148, [#allocation18], 128, 128, 8
    $region61: #{tpu_custom_call.1} parent=1 // pred_fallthru
      _
    // Predicated region
    $region62: #{tpu_custom_call.1} parent=1 // pred_check
      _
    $region63: #{tpu_custom_call.1} parent=1 // pred_check_branch
      %155 = sbr.rel (0) target = $region65
    $region64: #{tpu_custom_call.1} parent=1 // pred_region
      _
    $region65: #{tpu_custom_call.1} parent=1 // pred_fallthru
      _
    // Predicated region
    $region66: #{tpu_custom_call.1} parent=1 // pred_check
      _
    $region67: #{tpu_custom_call.1} parent=1 // pred_check_branch
      %157 = sbr.rel (0) target = $region69
    $region68: #{tpu_custom_call.1} parent=1 // pred_region
      %158 = dma.done [#allocation3], 128
    $region69: #{tpu_custom_call.1} parent=1 // pred_fallthru
      _
    // Predicated region
    $region70: #{tpu_custom_call.1} parent=1 // pred_check
      _
    $region71: #{tpu_custom_call.1} parent=1 // pred_check_branch
      %160 = sbr.rel (0) target = $region73
    $region72: #{tpu_custom_call.1} parent=1 // pred_region
      %161 = dma.done [#allocation6], 128
    $region73: #{tpu_custom_call.1} parent=1 // pred_fallthru
      _
    // Predicated region
    $region74: #{tpu_custom_call.1} parent=1 // pred_check
      _
    $region75: #{tpu_custom_call.1} parent=1 // pred_check_branch
      %163 = sbr.rel (0) target = $region77
    $region76: #{tpu_custom_call.1} parent=1 // pred_region
      %164 = dma.done [#allocation6], 2048
    $region77: #{tpu_custom_call.1} parent=1 // pred_fallthru
      _
    // Predicated region
    $region78: #{tpu_custom_call.1} parent=1 // pred_check
      _
    $region79: #{tpu_custom_call.1} parent=1 // pred_check_branch
      %166 = sbr.rel (0) target = $region81
    $region80: #{tpu_custom_call.1} parent=1 // pred_region
      %167 = dma.done [#allocation9], 2048
    $region81: #{tpu_custom_call.1} parent=1 // pred_fallthru
      _
    // Predicated region
    $region82: #{tpu_custom_call.1} parent=1 // pred_check
      _
    $region83: #{tpu_custom_call.1} parent=1 // pred_check_branch
      %169 = sbr.rel (0) target = $region85
    $region84: #{tpu_custom_call.1} parent=1 // pred_region
      %170 = dma.done [#allocation9], 2048
    $region85: #{tpu_custom_call.1} parent=1 // pred_fallthru
      _
    // Predicated region
    $region86: #{tpu_custom_call.1} parent=1 // pred_check
      _
    $region87: #{tpu_custom_call.1} parent=1 // pred_check_branch
      %172 = sbr.rel (0) target = $region89
    $region88: #{tpu_custom_call.1} parent=1 // pred_region
      %173 = dma.done [#allocation12], 2048
    $region89: #{tpu_custom_call.1} parent=1 // pred_fallthru
      _
    // Predicated region
    $region90: #{tpu_custom_call.1} parent=1 // pred_check
      _
    $region91: #{tpu_custom_call.1} parent=1 // pred_check_branch
      %175 = sbr.rel (0) target = $region93
    $region92: #{tpu_custom_call.1} parent=1 // pred_region
      %176 = dma.done [#allocation12], 2048
    $region93: #{tpu_custom_call.1} parent=1 // pred_fallthru
      _
    // Predicated region
    $region94: #{tpu_custom_call.1} parent=1 // pred_check
      _
    $region95: #{tpu_custom_call.1} parent=1 // pred_check_branch
      %178 = sbr.rel (0) target = $region97
    $region96: #{tpu_custom_call.1} parent=1 // pred_region
      %179 = dma.done [#allocation15], 2048
    $region97: #{tpu_custom_call.1} parent=1 // pred_fallthru
      _
    // Predicated region
    $region98: #{tpu_custom_call.1} parent=1 // pred_check
      _
    $region99: #{tpu_custom_call.1} parent=1 // pred_check_branch
      %181 = sbr.rel (0) target = $region101
    $region100: #{tpu_custom_call.1} parent=1 // pred_region
      %182 = dma.done [#allocation15], 2048
    $region101: #{tpu_custom_call.1} parent=1 // pred_fallthru
      _
    // Predicated region
    $region102: #{tpu_custom_call.1} parent=1 // pred_check
      _
    $region103: #{tpu_custom_call.1} parent=1 // pred_check_branch
      %184 = sbr.rel (0) target = $region105
    $region104: #{tpu_custom_call.1} parent=1 // pred_region
      %185 = dma.done [#allocation18], 2048
    $region105: #{tpu_custom_call.1} parent=1 // pred_fallthru
      _
    %v186 = vld [vmem:[#allocation2] sm:$0xff]
    %v187 = vld [vmem:[#allocation5] sm:$0xff]
    %v188 = vld [vmem:[#allocation7] sm:$0xff]
    %v189 = vld [vmem:[#allocation7 + $0x8] sm:$0xff]
    %v190 = vld [vmem:[#allocation7 + $0x10] sm:$0xff]
    %v191 = vld [vmem:[#allocation7 + $0x18] sm:$0xff]
    %v192 = vld [vmem:[#allocation7 + $0x20] sm:$0xff]
    %v193 = vld [vmem:[#allocation7 + $0x28] sm:$0xff]
    %v194 = vld [vmem:[#allocation7 + $0x30] sm:$0xff]
    %v195 = vld [vmem:[#allocation7 + $0x38] sm:$0xff]
    %v196 = vld [vmem:[#allocation7 + $0x40] sm:$0xff]
    %v197 = vld [vmem:[#allocation7 + $0x48] sm:$0xff]
    %v198 = vld [vmem:[#allocation7 + $0x50] sm:$0xff]
    %v199 = vld [vmem:[#allocation7 + $0x58] sm:$0xff]
    %v200 = vld [vmem:[#allocation7 + $0x60] sm:$0xff]
    %v201 = vld [vmem:[#allocation7 + $0x68] sm:$0xff]
    %v202 = vld [vmem:[#allocation7 + $0x70] sm:$0xff]
    %v203 = vld [vmem:[#allocation7 + $0x78] sm:$0xff]
    %204 = vmatprep.subr.mxu0 0.0
    %205 = vmatpush1.msra.mxu0 %v203
    %206 = vmatprep.subr.mxu0 0.0
    %207 = vmatpush1.msra.mxu0 %v202
    %208 = vmatprep.subr.mxu0 0.0
    %209 = vmatpush1.msra.mxu0 %v201
    %210 = vmatprep.subr.mxu0 0.0
    %211 = vmatpush1.msra.mxu0 %v200
    %212 = vmatprep.subr.mxu0 0.0
    %213 = vmatpush1.msra.mxu0 %v199
    %214 = vmatprep.subr.mxu0 0.0
    %215 = vmatpush1.msra.mxu0 %v198
    %216 = vmatprep.subr.mxu0 0.0
    %217 = vmatpush1.msra.mxu0 %v197
    %218 = vmatprep.subr.mxu0 0.0
    %219 = vmatpush1.msra.mxu0 %v196
    %220 = vmatprep.subr.mxu0 0.0
    %221 = vmatpush1.msra.mxu0 %v195
    %222 = vmatprep.subr.mxu0 0.0
    %223 = vmatpush1.msra.mxu0 %v194
    %224 = vmatprep.subr.mxu0 0.0
    %225 = vmatpush1.msra.mxu0 %v193
    %226 = vmatprep.subr.mxu0 0.0
    %227 = vmatpush1.msra.mxu0 %v192
    %228 = vmatprep.subr.mxu0 0.0
    %229 = vmatpush1.msra.mxu0 %v191
    %230 = vmatprep.subr.mxu0 0.0
    %231 = vmatpush1.msra.mxu0 %v190
    %232 = vmatprep.subr.mxu0 0.0
    %233 = vmatpush1.msra.mxu0 %v189
    %234 = vmatprep.subr.mxu0 0.0
    %235 = vmatpush1.msra.mxu0 %v188
    %236 = vmatprep.subr.mxu0 0.0
    %237 = vmatpush2.msra.mxu0 0.0
    %238 = vmatprep.subr.mxu0 0.0
    %239 = vmatpush2.msra.mxu0 0.0
    %240 = vmatprep.subr.mxu0 0.0
    %241 = vmatpush2.msra.mxu0 0.0
    %242 = vmatprep.subr.mxu0 0.0
    %243 = vmatpush2.msra.mxu0 0.0
    %244 = vmatprep.subr.mxu0 0.0
    %245 = vmatpush2.msra.mxu0 0.0
    %246 = vmatprep.subr.mxu0 0.0
    %247 = vmatpush2.msra.mxu0 0.0
    %248 = vmatprep.subr.mxu0 0.0
    %249 = vmatpush2.msra.mxu0 0.0
    %250 = vmatprep.subr.mxu0 0.0
    %251 = vmatpush2.msra.mxu0 0.0
    %252 = vmatprep.subr.mxu0 0.0
    %253 = vmatpush2.msra.mxu0 0.0
    %254 = vmatprep.subr.mxu0 0.0
    %255 = vmatpush2.msra.mxu0 0.0
    %256 = vmatprep.subr.mxu0 0.0
    %257 = vmatpush2.msra.mxu0 0.0
    %258 = vmatprep.subr.mxu0 0.0
    %259 = vmatpush2.msra.mxu0 0.0
    %260 = vmatprep.subr.mxu0 0.0
    %261 = vmatpush2.msra.mxu0 0.0
    %262 = vmatprep.subr.mxu0 0.0
    %263 = vmatpush2.msra.mxu0 0.0
    %264 = vmatprep.subr.mxu0 0.0
    %265 = vmatpush2.msra.mxu0 0.0
    %266 = vmatprep.subr.mxu0 0.0
    %267 = vmatpush2.msra.mxu0 0.0
    %268 = vmatprep.mubr.f32.mxu0 0.0
    %269 = vmatmul.mubr.f32.gmra.mxu0 %v186
    %v270 = vpop.f32.mrf.mxu0
    %v271 = vadd.f32 0.0, %v270
    %v272 = vpop.f32.mrf.mxu0
    %273 = vdwg.mxu0
    %v274 = vld [vmem:[#allocation8] sm:$0xff]
    %v275 = vld [vmem:[#allocation8 + $0x8] sm:$0xff]
    %v276 = vld [vmem:[#allocation8 + $0x10] sm:$0xff]
    %v277 = vld [vmem:[#allocation8 + $0x18] sm:$0xff]
    %v278 = vld [vmem:[#allocation8 + $0x20] sm:$0xff]
    %v279 = vld [vmem:[#allocation8 + $0x28] sm:$0xff]
    %v280 = vld [vmem:[#allocation8 + $0x30] sm:$0xff]
    %v281 = vld [vmem:[#allocation8 + $0x38] sm:$0xff]
    %v282 = vld [vmem:[#allocation8 + $0x40] sm:$0xff]
    %v283 = vld [vmem:[#allocation8 + $0x48] sm:$0xff]
    %v284 = vld [vmem:[#allocation8 + $0x50] sm:$0xff]
    %v285 = vld [vmem:[#allocation8 + $0x58] sm:$0xff]
    %v286 = vld [vmem:[#allocation8 + $0x60] sm:$0xff]
    %v287 = vld [vmem:[#allocation8 + $0x68] sm:$0xff]
    %v288 = vld [vmem:[#allocation8 + $0x70] sm:$0xff]
    %v289 = vld [vmem:[#allocation8 + $0x78] sm:$0xff]
    %290 = vmatprep.subr.mxu0 0.0
    %291 = vmatpush1.msra.mxu0 %v289
    %292 = vmatprep.subr.mxu0 0.0
    %293 = vmatpush1.msra.mxu0 %v288
    %294 = vmatprep.subr.mxu0 0.0
    %295 = vmatpush1.msra.mxu0 %v287
    %296 = vmatprep.subr.mxu0 0.0
    %297 = vmatpush1.msra.mxu0 %v286
    %298 = vmatprep.subr.mxu0 0.0
    %299 = vmatpush1.msra.mxu0 %v285
    %300 = vmatprep.subr.mxu0 0.0
    %301 = vmatpush1.msra.mxu0 %v284
    %302 = vmatprep.subr.mxu0 0.0
    %303 = vmatpush1.msra.mxu0 %v283
    %304 = vmatprep.subr.mxu0 0.0
    %305 = vmatpush1.msra.mxu0 %v282
    %306 = vmatprep.subr.mxu0 0.0
    %307 = vmatpush1.msra.mxu0 %v281
    %308 = vmatprep.subr.mxu0 0.0
    %309 = vmatpush1.msra.mxu0 %v280
    %310 = vmatprep.subr.mxu0 0.0
    %311 = vmatpush1.msra.mxu0 %v279
    %312 = vmatprep.subr.mxu0 0.0
    %313 = vmatpush1.msra.mxu0 %v278
    %314 = vmatprep.subr.mxu0 0.0
    %315 = vmatpush1.msra.mxu0 %v277
    %316 = vmatprep.subr.mxu0 0.0
    %317 = vmatpush1.msra.mxu0 %v276
    %318 = vmatprep.subr.mxu0 0.0
    %319 = vmatpush1.msra.mxu0 %v275
    %320 = vmatprep.subr.mxu0 0.0
    %321 = vmatpush1.msra.mxu0 %v274
    %322 = vmatprep.subr.mxu0 0.0
    %323 = vmatpush2.msra.mxu0 0.0
    %324 = vmatprep.subr.mxu0 0.0
    %325 = vmatpush2.msra.mxu0 0.0
    %326 = vmatprep.subr.mxu0 0.0
    %327 = vmatpush2.msra.mxu0 0.0
    %328 = vmatprep.subr.mxu0 0.0
    %329 = vmatpush2.msra.mxu0 0.0
    %330 = vmatprep.subr.mxu0 0.0
    %331 = vmatpush2.msra.mxu0 0.0
    %332 = vmatprep.subr.mxu0 0.0
    %333 = vmatpush2.msra.mxu0 0.0
    %334 = vmatprep.subr.mxu0 0.0
    %335 = vmatpush2.msra.mxu0 0.0
    %336 = vmatprep.subr.mxu0 0.0
    %337 = vmatpush2.msra.mxu0 0.0
    %338 = vmatprep.subr.mxu0 0.0
    %339 = vmatpush2.msra.mxu0 0.0
    %340 = vmatprep.subr.mxu0 0.0
    %341 = vmatpush2.msra.mxu0 0.0
    %342 = vmatprep.subr.mxu0 0.0
    %343 = vmatpush2.msra.mxu0 0.0
    %344 = vmatprep.subr.mxu0 0.0
    %345 = vmatpush2.msra.mxu0 0.0
    %346 = vmatprep.subr.mxu0 0.0
    %347 = vmatpush2.msra.mxu0 0.0
    %348 = vmatprep.subr.mxu0 0.0
    %349 = vmatpush2.msra.mxu0 0.0
    %350 = vmatprep.subr.mxu0 0.0
    %351 = vmatpush2.msra.mxu0 0.0
    %352 = vmatprep.subr.mxu0 0.0
    %353 = vmatpush2.msra.mxu0 0.0
    %354 = vmatprep.mubr.f32.mxu0 0.0
    %355 = vmatmul.mubr.f32.gmra.mxu0 %v187
    %v356 = vpop.f32.mrf.mxu0
    %v357 = vadd.f32 0.0, %v356
    %v358 = vpop.f32.mrf.mxu0
    %359 = vdwg.mxu0
    %v360 = vld [vmem:[#allocation10] sm:$0xff]
    %v361 = vld [vmem:[#allocation10 + $0x8] sm:$0xff]
    %v362 = vld [vmem:[#allocation10 + $0x10] sm:$0xff]
    %v363 = vld [vmem:[#allocation10 + $0x18] sm:$0xff]
    %v364 = vld [vmem:[#allocation10 + $0x20] sm:$0xff]
    %v365 = vld [vmem:[#allocation10 + $0x28] sm:$0xff]
    %v366 = vld [vmem:[#allocation10 + $0x30] sm:$0xff]
    %v367 = vld [vmem:[#allocation10 + $0x38] sm:$0xff]
    %v368 = vld [vmem:[#allocation10 + $0x40] sm:$0xff]
    %v369 = vld [vmem:[#allocation10 + $0x48] sm:$0xff]
    %v370 = vld [vmem:[#allocation10 + $0x50] sm:$0xff]
    %v371 = vld [vmem:[#allocation10 + $0x58] sm:$0xff]
    %v372 = vld [vmem:[#allocation10 + $0x60] sm:$0xff]
    %v373 = vld [vmem:[#allocation10 + $0x68] sm:$0xff]
    %v374 = vld [vmem:[#allocation10 + $0x70] sm:$0xff]
    %v375 = vld [vmem:[#allocation10 + $0x78] sm:$0xff]
    %376 = vmatprep.subr.mxu0 0.0
    %377 = vmatpush1.msra.mxu0 %v375
    %378 = vmatprep.subr.mxu0 0.0
    %379 = vmatpush1.msra.mxu0 %v374
    %380 = vmatprep.subr.mxu0 0.0
    %381 = vmatpush1.msra.mxu0 %v373
    %382 = vmatprep.subr.mxu0 0.0
    %383 = vmatpush1.msra.mxu0 %v372
    %384 = vmatprep.subr.mxu0 0.0
    %385 = vmatpush1.msra.mxu0 %v371
    %386 = vmatprep.subr.mxu0 0.0
    %387 = vmatpush1.msra.mxu0 %v370
    %388 = vmatprep.subr.mxu0 0.0
    %389 = vmatpush1.msra.mxu0 %v369
    %390 = vmatprep.subr.mxu0 0.0
    %391 = vmatpush1.msra.mxu0 %v368
    %392 = vmatprep.subr.mxu0 0.0
    %393 = vmatpush1.msra.mxu0 %v367
    %394 = vmatprep.subr.mxu0 0.0
    %395 = vmatpush1.msra.mxu0 %v366
    %396 = vmatprep.subr.mxu0 0.0
    %397 = vmatpush1.msra.mxu0 %v365
    %398 = vmatprep.subr.mxu0 0.0
    %399 = vmatpush1.msra.mxu0 %v364
    %400 = vmatprep.subr.mxu0 0.0
    %401 = vmatpush1.msra.mxu0 %v363
    %402 = vmatprep.subr.mxu0 0.0
    %403 = vmatpush1.msra.mxu0 %v362
    %404 = vmatprep.subr.mxu0 0.0
    %405 = vmatpush1.msra.mxu0 %v361
    %406 = vmatprep.subr.mxu0 0.0
    %407 = vmatpush1.msra.mxu0 %v360
    %408 = vmatprep.subr.mxu0 0.0
    %409 = vmatpush2.msra.mxu0 0.0
    %410 = vmatprep.subr.mxu0 0.0
    %411 = vmatpush2.msra.mxu0 0.0
    %412 = vmatprep.subr.mxu0 0.0
    %413 = vmatpush2.msra.mxu0 0.0
    %414 = vmatprep.subr.mxu0 0.0
    %415 = vmatpush2.msra.mxu0 0.0
    %416 = vmatprep.subr.mxu0 0.0
    %417 = vmatpush2.msra.mxu0 0.0
    %418 = vmatprep.subr.mxu0 0.0
    %419 = vmatpush2.msra.mxu0 0.0
    %420 = vmatprep.subr.mxu0 0.0
    %421 = vmatpush2.msra.mxu0 0.0
    %422 = vmatprep.subr.mxu0 0.0
    %423 = vmatpush2.msra.mxu0 0.0
    %424 = vmatprep.subr.mxu0 0.0
    %425 = vmatpush2.msra.mxu0 0.0
    %426 = vmatprep.subr.mxu0 0.0
    %427 = vmatpush2.msra.mxu0 0.0
    %428 = vmatprep.subr.mxu0 0.0
    %429 = vmatpush2.msra.mxu0 0.0
    %430 = vmatprep.subr.mxu0 0.0
    %431 = vmatpush2.msra.mxu0 0.0
    %432 = vmatprep.subr.mxu0 0.0
    %433 = vmatpush2.msra.mxu0 0.0
    %434 = vmatprep.subr.mxu0 0.0
    %435 = vmatpush2.msra.mxu0 0.0
    %436 = vmatprep.subr.mxu0 0.0
    %437 = vmatpush2.msra.mxu0 0.0
    %438 = vmatprep.subr.mxu0 0.0
    %439 = vmatpush2.msra.mxu0 0.0
    %440 = vmatprep.mubr.f32.mxu0 0.0
    %441 = vmatmul.mubr.f32.gmra.mxu0 %v187
    %v442 = vpop.f32.mrf.mxu0
    %v443 = vadd.f32 0.0, %v442
    %v444 = vpop.f32.mrf.mxu0
    %445 = vdwg.mxu0
    %v446 = vld [vmem:[%s5] sm:$0x1]
    %v448 = vlaneseq
    %v449 = vshrl.u32 %v448, 7
    %v450 = vsub.s32 0, %v449
    %v451 = vrot.slane %v446, %v450
    %v453 = vsub.f32 %v271, %v451
    %v454 = vsub.f32 %v453, %v357
    %v455 = vmax.f32 %v454, 0.0
    %v456 = vld [vmem:[%s6] sm:$0x1]
    %v458 = vlaneseq
    %v459 = vshrl.u32 %v458, 7
    %v460 = vsub.s32 0, %v459
    %v461 = vrot.slane %v456, %v460
    %v463 = vadd.f32 %v461, %v443
    %v464 = vsub.f32 %v463, %v271
    %v465 = vmax.f32 %v464, 0.0
    %v466 = vmul.f32 %v455, %v465
    %v467 = vmul.f32 %v466, 6.25
    %v468 = vmul.f32 %v467, %v467
    %v469 = vld [vmem:[#allocation11] sm:$0xff]
    %v470 = vld [vmem:[#allocation11 + $0x8] sm:$0xff]
    %v471 = vld [vmem:[#allocation11 + $0x10] sm:$0xff]
    %v472 = vld [vmem:[#allocation11 + $0x18] sm:$0xff]
    %v473 = vld [vmem:[#allocation11 + $0x20] sm:$0xff]
    %v474 = vld [vmem:[#allocation11 + $0x28] sm:$0xff]
    %v475 = vld [vmem:[#allocation11 + $0x30] sm:$0xff]
    %v476 = vld [vmem:[#allocation11 + $0x38] sm:$0xff]
    %v477 = vld [vmem:[#allocation11 + $0x40] sm:$0xff]
    %v478 = vld [vmem:[#allocation11 + $0x48] sm:$0xff]
    %v479 = vld [vmem:[#allocation11 + $0x50] sm:$0xff]
    %v480 = vld [vmem:[#allocation11 + $0x58] sm:$0xff]
    %v481 = vld [vmem:[#allocation11 + $0x60] sm:$0xff]
    %v482 = vld [vmem:[#allocation11 + $0x68] sm:$0xff]
    %v483 = vld [vmem:[#allocation11 + $0x70] sm:$0xff]
    %v484 = vld [vmem:[#allocation11 + $0x78] sm:$0xff]
    %v485 = vld [vmem:[%s8] sm:$0x1]
    %v487 = vlaneseq
    %v488 = vshrl.u32 %v487, 7
    %v489 = vsub.s32 0, %v488
    %v490 = vrot.slane %v485, %v489
    %492 = vmatprep.subr.mxu0 0.0
    %493 = vmatpush1.msra.mxu0 %v484
    %494 = vmatprep.subr.mxu0 0.0
    %495 = vmatpush1.msra.mxu0 %v483
    %496 = vmatprep.subr.mxu0 0.0
    %497 = vmatpush1.msra.mxu0 %v482
    %498 = vmatprep.subr.mxu0 0.0
    %499 = vmatpush1.msra.mxu0 %v481
    %500 = vmatprep.subr.mxu0 0.0
    %501 = vmatpush1.msra.mxu0 %v480
    %502 = vmatprep.subr.mxu0 0.0
    %503 = vmatpush1.msra.mxu0 %v479
    %504 = vmatprep.subr.mxu0 0.0
    %505 = vmatpush1.msra.mxu0 %v478
    %506 = vmatprep.subr.mxu0 0.0
    %507 = vmatpush1.msra.mxu0 %v477
    %508 = vmatprep.subr.mxu0 0.0
    %509 = vmatpush1.msra.mxu0 %v476
    %510 = vmatprep.subr.mxu0 0.0
    %511 = vmatpush1.msra.mxu0 %v475
    %512 = vmatprep.subr.mxu0 0.0
    %513 = vmatpush1.msra.mxu0 %v474
    %514 = vmatprep.subr.mxu0 0.0
    %515 = vmatpush1.msra.mxu0 %v473
    %516 = vmatprep.subr.mxu0 0.0
    %517 = vmatpush1.msra.mxu0 %v472
    %518 = vmatprep.subr.mxu0 0.0
    %519 = vmatpush1.msra.mxu0 %v471
    %520 = vmatprep.subr.mxu0 0.0
    %521 = vmatpush1.msra.mxu0 %v470
    %522 = vmatprep.subr.mxu0 0.0
    %523 = vmatpush1.msra.mxu0 %v469
    %524 = vmatprep.subr.mxu0 0.0
    %525 = vmatpush2.msra.mxu0 0.0
    %526 = vmatprep.subr.mxu0 0.0
    %527 = vmatpush2.msra.mxu0 0.0
    %528 = vmatprep.subr.mxu0 0.0
    %529 = vmatpush2.msra.mxu0 0.0
    %530 = vmatprep.subr.mxu0 0.0
    %531 = vmatpush2.msra.mxu0 0.0
    %532 = vmatprep.subr.mxu0 0.0
    %533 = vmatpush2.msra.mxu0 0.0
    %534 = vmatprep.subr.mxu0 0.0
    %535 = vmatpush2.msra.mxu0 0.0
    %536 = vmatprep.subr.mxu0 0.0
    %537 = vmatpush2.msra.mxu0 0.0
    %538 = vmatprep.subr.mxu0 0.0
    %539 = vmatpush2.msra.mxu0 0.0
    %540 = vmatprep.subr.mxu0 0.0
    %541 = vmatpush2.msra.mxu0 0.0
    %542 = vmatprep.subr.mxu0 0.0
    %543 = vmatpush2.msra.mxu0 0.0
    %544 = vmatprep.subr.mxu0 0.0
    %545 = vmatpush2.msra.mxu0 0.0
    %546 = vmatprep.subr.mxu0 0.0
    %547 = vmatpush2.msra.mxu0 0.0
    %548 = vmatprep.subr.mxu0 0.0
    %549 = vmatpush2.msra.mxu0 0.0
    %550 = vmatprep.subr.mxu0 0.0
    %551 = vmatpush2.msra.mxu0 0.0
    %552 = vmatprep.subr.mxu0 0.0
    %553 = vmatpush2.msra.mxu0 0.0
    %554 = vmatprep.subr.mxu0 0.0
    %555 = vmatpush2.msra.mxu0 0.0
    %556 = vmatprep.mubr.f32.mxu0 0.0
    %557 = vmatmul.mubr.f32.gmra.mxu0 %v468
    %v558 = vpop.f32.mrf.mxu0
    %v559 = vadd.f32 %v490, %v558
    %v560 = vpop.f32.mrf.mxu0
    %561 = vdwg.mxu0
    %v562 = vld [vmem:[#allocation13] sm:$0xff]
    %v563 = vld [vmem:[#allocation13 + $0x8] sm:$0xff]
    %v564 = vld [vmem:[#allocation13 + $0x10] sm:$0xff]
    %v565 = vld [vmem:[#allocation13 + $0x18] sm:$0xff]
    %v566 = vld [vmem:[#allocation13 + $0x20] sm:$0xff]
    %v567 = vld [vmem:[#allocation13 + $0x28] sm:$0xff]
    %v568 = vld [vmem:[#allocation13 + $0x30] sm:$0xff]
    %v569 = vld [vmem:[#allocation13 + $0x38] sm:$0xff]
    %v570 = vld [vmem:[#allocation13 + $0x40] sm:$0xff]
    %v571 = vld [vmem:[#allocation13 + $0x48] sm:$0xff]
    %v572 = vld [vmem:[#allocation13 + $0x50] sm:$0xff]
    %v573 = vld [vmem:[#allocation13 + $0x58] sm:$0xff]
    %v574 = vld [vmem:[#allocation13 + $0x60] sm:$0xff]
    %v575 = vld [vmem:[#allocation13 + $0x68] sm:$0xff]
    %v576 = vld [vmem:[#allocation13 + $0x70] sm:$0xff]
    %v577 = vld [vmem:[#allocation13 + $0x78] sm:$0xff]
    %578 = vmatprep.subr.mxu0 0.0
    %579 = vmatpush1.msra.mxu0 %v577
    %580 = vmatprep.subr.mxu0 0.0
    %581 = vmatpush1.msra.mxu0 %v576
    %582 = vmatprep.subr.mxu0 0.0
    %583 = vmatpush1.msra.mxu0 %v575
    %584 = vmatprep.subr.mxu0 0.0
    %585 = vmatpush1.msra.mxu0 %v574
    %586 = vmatprep.subr.mxu0 0.0
    %587 = vmatpush1.msra.mxu0 %v573
    %588 = vmatprep.subr.mxu0 0.0
    %589 = vmatpush1.msra.mxu0 %v572
    %590 = vmatprep.subr.mxu0 0.0
    %591 = vmatpush1.msra.mxu0 %v571
    %592 = vmatprep.subr.mxu0 0.0
    %593 = vmatpush1.msra.mxu0 %v570
    %594 = vmatprep.subr.mxu0 0.0
    %595 = vmatpush1.msra.mxu0 %v569
    %596 = vmatprep.subr.mxu0 0.0
    %597 = vmatpush1.msra.mxu0 %v568
    %598 = vmatprep.subr.mxu0 0.0
    %599 = vmatpush1.msra.mxu0 %v567
    %600 = vmatprep.subr.mxu0 0.0
    %601 = vmatpush1.msra.mxu0 %v566
    %602 = vmatprep.subr.mxu0 0.0
    %603 = vmatpush1.msra.mxu0 %v565
    %604 = vmatprep.subr.mxu0 0.0
    %605 = vmatpush1.msra.mxu0 %v564
    %606 = vmatprep.subr.mxu0 0.0
    %607 = vmatpush1.msra.mxu0 %v563
    %608 = vmatprep.subr.mxu0 0.0
    %609 = vmatpush1.msra.mxu0 %v562
    %610 = vmatprep.subr.mxu0 0.0
    %611 = vmatpush2.msra.mxu0 0.0
    %612 = vmatprep.subr.mxu0 0.0
    %613 = vmatpush2.msra.mxu0 0.0
    %614 = vmatprep.subr.mxu0 0.0
    %615 = vmatpush2.msra.mxu0 0.0
    %616 = vmatprep.subr.mxu0 0.0
    %617 = vmatpush2.msra.mxu0 0.0
    %618 = vmatprep.subr.mxu0 0.0
    %619 = vmatpush2.msra.mxu0 0.0
    %620 = vmatprep.subr.mxu0 0.0
    %621 = vmatpush2.msra.mxu0 0.0
    %622 = vmatprep.subr.mxu0 0.0
    %623 = vmatpush2.msra.mxu0 0.0
    %624 = vmatprep.subr.mxu0 0.0
    %625 = vmatpush2.msra.mxu0 0.0
    %626 = vmatprep.subr.mxu0 0.0
    %627 = vmatpush2.msra.mxu0 0.0
    %628 = vmatprep.subr.mxu0 0.0
    %629 = vmatpush2.msra.mxu0 0.0
    %630 = vmatprep.subr.mxu0 0.0
    %631 = vmatpush2.msra.mxu0 0.0
    %632 = vmatprep.subr.mxu0 0.0
    %633 = vmatpush2.msra.mxu0 0.0
    %634 = vmatprep.subr.mxu0 0.0
    %635 = vmatpush2.msra.mxu0 0.0
    %636 = vmatprep.subr.mxu0 0.0
    %637 = vmatpush2.msra.mxu0 0.0
    %638 = vmatprep.subr.mxu0 0.0
    %639 = vmatpush2.msra.mxu0 0.0
    %640 = vmatprep.subr.mxu0 0.0
    %641 = vmatpush2.msra.mxu0 0.0
    %642 = vmatprep.mubr.f32.mxu0 0.0
    %643 = vmatmul.mubr.f32.gmra.mxu0 %v559
    %v644 = vpop.f32.mrf.mxu0
    %v645 = vadd.f32 0.0, %v644
    %v646 = vpop.f32.mrf.mxu0
    %647 = vdwg.mxu0
    %v648 = vld [vmem:[#allocation14] sm:$0xff]
    %v649 = vld [vmem:[#allocation14 + $0x8] sm:$0xff]
    %v650 = vld [vmem:[#allocation14 + $0x10] sm:$0xff]
    %v651 = vld [vmem:[#allocation14 + $0x18] sm:$0xff]
    %v652 = vld [vmem:[#allocation14 + $0x20] sm:$0xff]
    %v653 = vld [vmem:[#allocation14 + $0x28] sm:$0xff]
    %v654 = vld [vmem:[#allocation14 + $0x30] sm:$0xff]
    %v655 = vld [vmem:[#allocation14 + $0x38] sm:$0xff]
    %v656 = vld [vmem:[#allocation14 + $0x40] sm:$0xff]
    %v657 = vld [vmem:[#allocation14 + $0x48] sm:$0xff]
    %v658 = vld [vmem:[#allocation14 + $0x50] sm:$0xff]
    %v659 = vld [vmem:[#allocation14 + $0x58] sm:$0xff]
    %v660 = vld [vmem:[#allocation14 + $0x60] sm:$0xff]
    %v661 = vld [vmem:[#allocation14 + $0x68] sm:$0xff]
    %v662 = vld [vmem:[#allocation14 + $0x70] sm:$0xff]
    %v663 = vld [vmem:[#allocation14 + $0x78] sm:$0xff]
    %664 = vmatprep.subr.mxu0 0.0
    %665 = vmatpush1.msra.mxu0 %v663
    %666 = vmatprep.subr.mxu0 0.0
    %667 = vmatpush1.msra.mxu0 %v662
    %668 = vmatprep.subr.mxu0 0.0
    %669 = vmatpush1.msra.mxu0 %v661
    %670 = vmatprep.subr.mxu0 0.0
    %671 = vmatpush1.msra.mxu0 %v660
    %672 = vmatprep.subr.mxu0 0.0
    %673 = vmatpush1.msra.mxu0 %v659
    %674 = vmatprep.subr.mxu0 0.0
    %675 = vmatpush1.msra.mxu0 %v658
    %676 = vmatprep.subr.mxu0 0.0
    %677 = vmatpush1.msra.mxu0 %v657
    %678 = vmatprep.subr.mxu0 0.0
    %679 = vmatpush1.msra.mxu0 %v656
    %680 = vmatprep.subr.mxu0 0.0
    %681 = vmatpush1.msra.mxu0 %v655
    %682 = vmatprep.subr.mxu0 0.0
    %683 = vmatpush1.msra.mxu0 %v654
    %684 = vmatprep.subr.mxu0 0.0
    %685 = vmatpush1.msra.mxu0 %v653
    %686 = vmatprep.subr.mxu0 0.0
    %687 = vmatpush1.msra.mxu0 %v652
    %688 = vmatprep.subr.mxu0 0.0
    %689 = vmatpush1.msra.mxu0 %v651
    %690 = vmatprep.subr.mxu0 0.0
    %691 = vmatpush1.msra.mxu0 %v650
    %692 = vmatprep.subr.mxu0 0.0
    %693 = vmatpush1.msra.mxu0 %v649
    %694 = vmatprep.subr.mxu0 0.0
    %695 = vmatpush1.msra.mxu0 %v648
    %696 = vmatprep.subr.mxu0 0.0
    %697 = vmatpush2.msra.mxu0 0.0
    %698 = vmatprep.subr.mxu0 0.0
    %699 = vmatpush2.msra.mxu0 0.0
    %700 = vmatprep.subr.mxu0 0.0
    %701 = vmatpush2.msra.mxu0 0.0
    %702 = vmatprep.subr.mxu0 0.0
    %703 = vmatpush2.msra.mxu0 0.0
    %704 = vmatprep.subr.mxu0 0.0
    %705 = vmatpush2.msra.mxu0 0.0
    %706 = vmatprep.subr.mxu0 0.0
    %707 = vmatpush2.msra.mxu0 0.0
    %708 = vmatprep.subr.mxu0 0.0
    %709 = vmatpush2.msra.mxu0 0.0
    %710 = vmatprep.subr.mxu0 0.0
    %711 = vmatpush2.msra.mxu0 0.0
    %712 = vmatprep.subr.mxu0 0.0
    %713 = vmatpush2.msra.mxu0 0.0
    %714 = vmatprep.subr.mxu0 0.0
    %715 = vmatpush2.msra.mxu0 0.0
    %716 = vmatprep.subr.mxu0 0.0
    %717 = vmatpush2.msra.mxu0 0.0
    %718 = vmatprep.subr.mxu0 0.0
    %719 = vmatpush2.msra.mxu0 0.0
    %720 = vmatprep.subr.mxu0 0.0
    %721 = vmatpush2.msra.mxu0 0.0
    %722 = vmatprep.subr.mxu0 0.0
    %723 = vmatpush2.msra.mxu0 0.0
    %724 = vmatprep.subr.mxu0 0.0
    %725 = vmatpush2.msra.mxu0 0.0
    %726 = vmatprep.subr.mxu0 0.0
    %727 = vmatpush2.msra.mxu0 0.0
    %728 = vmatprep.mubr.f32.mxu0 0.0
    %729 = vmatmul.mubr.f32.gmra.mxu0 %v187
    %v730 = vpop.f32.mrf.mxu0
    %v731 = vadd.f32 0.0, %v730
    %v732 = vpop.f32.mrf.mxu0
    %733 = vdwg.mxu0
    %v734 = vld [vmem:[#allocation16] sm:$0xff]
    %v735 = vld [vmem:[#allocation16 + $0x8] sm:$0xff]
    %v736 = vld [vmem:[#allocation16 + $0x10] sm:$0xff]
    %v737 = vld [vmem:[#allocation16 + $0x18] sm:$0xff]
    %v738 = vld [vmem:[#allocation16 + $0x20] sm:$0xff]
    %v739 = vld [vmem:[#allocation16 + $0x28] sm:$0xff]
    %v740 = vld [vmem:[#allocation16 + $0x30] sm:$0xff]
    %v741 = vld [vmem:[#allocation16 + $0x38] sm:$0xff]
    %v742 = vld [vmem:[#allocation16 + $0x40] sm:$0xff]
    %v743 = vld [vmem:[#allocation16 + $0x48] sm:$0xff]
    %v744 = vld [vmem:[#allocation16 + $0x50] sm:$0xff]
    %v745 = vld [vmem:[#allocation16 + $0x58] sm:$0xff]
    %v746 = vld [vmem:[#allocation16 + $0x60] sm:$0xff]
    %v747 = vld [vmem:[#allocation16 + $0x68] sm:$0xff]
    %v748 = vld [vmem:[#allocation16 + $0x70] sm:$0xff]
    %v749 = vld [vmem:[#allocation16 + $0x78] sm:$0xff]
    %750 = vmatprep.subr.mxu0 0.0
    %751 = vmatpush1.msra.mxu0 %v749
    %752 = vmatprep.subr.mxu0 0.0
    %753 = vmatpush1.msra.mxu0 %v748
    %754 = vmatprep.subr.mxu0 0.0
    %755 = vmatpush1.msra.mxu0 %v747
    %756 = vmatprep.subr.mxu0 0.0
    %757 = vmatpush1.msra.mxu0 %v746
    %758 = vmatprep.subr.mxu0 0.0
    %759 = vmatpush1.msra.mxu0 %v745
    %760 = vmatprep.subr.mxu0 0.0
    %761 = vmatpush1.msra.mxu0 %v744
    %762 = vmatprep.subr.mxu0 0.0
    %763 = vmatpush1.msra.mxu0 %v743
    %764 = vmatprep.subr.mxu0 0.0
    %765 = vmatpush1.msra.mxu0 %v742
    %766 = vmatprep.subr.mxu0 0.0
    %767 = vmatpush1.msra.mxu0 %v741
    %768 = vmatprep.subr.mxu0 0.0
    %769 = vmatpush1.msra.mxu0 %v740
    %770 = vmatprep.subr.mxu0 0.0
    %771 = vmatpush1.msra.mxu0 %v739
    %772 = vmatprep.subr.mxu0 0.0
    %773 = vmatpush1.msra.mxu0 %v738
    %774 = vmatprep.subr.mxu0 0.0
    %775 = vmatpush1.msra.mxu0 %v737
    %776 = vmatprep.subr.mxu0 0.0
    %777 = vmatpush1.msra.mxu0 %v736
    %778 = vmatprep.subr.mxu0 0.0
    %779 = vmatpush1.msra.mxu0 %v735
    %780 = vmatprep.subr.mxu0 0.0
    %781 = vmatpush1.msra.mxu0 %v734
    %782 = vmatprep.subr.mxu0 0.0
    %783 = vmatpush2.msra.mxu0 0.0
    %784 = vmatprep.subr.mxu0 0.0
    %785 = vmatpush2.msra.mxu0 0.0
    %786 = vmatprep.subr.mxu0 0.0
    %787 = vmatpush2.msra.mxu0 0.0
    %788 = vmatprep.subr.mxu0 0.0
    %789 = vmatpush2.msra.mxu0 0.0
    %790 = vmatprep.subr.mxu0 0.0
    %791 = vmatpush2.msra.mxu0 0.0
    %792 = vmatprep.subr.mxu0 0.0
    %793 = vmatpush2.msra.mxu0 0.0
    %794 = vmatprep.subr.mxu0 0.0
    %795 = vmatpush2.msra.mxu0 0.0
    %796 = vmatprep.subr.mxu0 0.0
    %797 = vmatpush2.msra.mxu0 0.0
    %798 = vmatprep.subr.mxu0 0.0
    %799 = vmatpush2.msra.mxu0 0.0
    %800 = vmatprep.subr.mxu0 0.0
    %801 = vmatpush2.msra.mxu0 0.0
    %802 = vmatprep.subr.mxu0 0.0
    %803 = vmatpush2.msra.mxu0 0.0
    %804 = vmatprep.subr.mxu0 0.0
    %805 = vmatpush2.msra.mxu0 0.0
    %806 = vmatprep.subr.mxu0 0.0
    %807 = vmatpush2.msra.mxu0 0.0
    %808 = vmatprep.subr.mxu0 0.0
    %809 = vmatpush2.msra.mxu0 0.0
    %810 = vmatprep.subr.mxu0 0.0
    %811 = vmatpush2.msra.mxu0 0.0
    %812 = vmatprep.subr.mxu0 0.0
    %813 = vmatpush2.msra.mxu0 0.0
    %814 = vmatprep.mubr.f32.mxu0 0.0
    %815 = vmatmul.mubr.f32.gmra.mxu0 %v187
    %v816 = vpop.f32.mrf.mxu0
    %v817 = vadd.f32 0.0, %v816
    %v818 = vpop.f32.mrf.mxu0
    %819 = vdwg.mxu0
    %v820 = vld [vmem:[%s12] sm:$0x1]
    %v822 = vlaneseq
    %v823 = vshrl.u32 %v822, 7
    %v824 = vsub.s32 0, %v823
    %v825 = vrot.slane %v820, %v824
    %v827 = vsub.f32 %v645, %v825
    %v828 = vsub.f32 %v827, %v731
    %v829 = vmax.f32 %v828, 0.0
    %v830 = vld [vmem:[%s13] sm:$0x1]
    %v832 = vlaneseq
    %v833 = vshrl.u32 %v832, 7
    %v834 = vsub.s32 0, %v833
    %v835 = vrot.slane %v830, %v834
    %v837 = vadd.f32 %v835, %v817
    %v838 = vsub.f32 %v837, %v645
    %v839 = vmax.f32 %v838, 0.0
    %v840 = vmul.f32 %v829, %v839
    %v841 = vmul.f32 %v840, 6.25
    %v842 = vmul.f32 %v841, %v841
    %v843 = vld [vmem:[#allocation17] sm:$0xff]
    %v844 = vld [vmem:[#allocation17 + $0x8] sm:$0xff]
    %v845 = vld [vmem:[#allocation17 + $0x10] sm:$0xff]
    %v846 = vld [vmem:[#allocation17 + $0x18] sm:$0xff]
    %v847 = vld [vmem:[#allocation17 + $0x20] sm:$0xff]
    %v848 = vld [vmem:[#allocation17 + $0x28] sm:$0xff]
    %v849 = vld [vmem:[#allocation17 + $0x30] sm:$0xff]
    %v850 = vld [vmem:[#allocation17 + $0x38] sm:$0xff]
    %v851 = vld [vmem:[#allocation17 + $0x40] sm:$0xff]
    %v852 = vld [vmem:[#allocation17 + $0x48] sm:$0xff]
    %v853 = vld [vmem:[#allocation17 + $0x50] sm:$0xff]
    %v854 = vld [vmem:[#allocation17 + $0x58] sm:$0xff]
    %v855 = vld [vmem:[#allocation17 + $0x60] sm:$0xff]
    %v856 = vld [vmem:[#allocation17 + $0x68] sm:$0xff]
    %v857 = vld [vmem:[#allocation17 + $0x70] sm:$0xff]
    %v858 = vld [vmem:[#allocation17 + $0x78] sm:$0xff]
    %v859 = vld [vmem:[%s15] sm:$0x1]
    %v861 = vlaneseq
    %v862 = vshrl.u32 %v861, 7
    %v863 = vsub.s32 0, %v862
    %v864 = vrot.slane %v859, %v863
    %866 = vmatprep.subr.mxu0 0.0
    %867 = vmatpush1.msra.mxu0 %v858
    %868 = vmatprep.subr.mxu0 0.0
    %869 = vmatpush1.msra.mxu0 %v857
    %870 = vmatprep.subr.mxu0 0.0
    %871 = vmatpush1.msra.mxu0 %v856
    %872 = vmatprep.subr.mxu0 0.0
    %873 = vmatpush1.msra.mxu0 %v855
    %874 = vmatprep.subr.mxu0 0.0
    %875 = vmatpush1.msra.mxu0 %v854
    %876 = vmatprep.subr.mxu0 0.0
    %877 = vmatpush1.msra.mxu0 %v853
    %878 = vmatprep.subr.mxu0 0.0
    %879 = vmatpush1.msra.mxu0 %v852
    %880 = vmatprep.subr.mxu0 0.0
    %881 = vmatpush1.msra.mxu0 %v851
    %882 = vmatprep.subr.mxu0 0.0
    %883 = vmatpush1.msra.mxu0 %v850
    %884 = vmatprep.subr.mxu0 0.0
    %885 = vmatpush1.msra.mxu0 %v849
    %886 = vmatprep.subr.mxu0 0.0
    %887 = vmatpush1.msra.mxu0 %v848
    %888 = vmatprep.subr.mxu0 0.0
    %889 = vmatpush1.msra.mxu0 %v847
    %890 = vmatprep.subr.mxu0 0.0
    %891 = vmatpush1.msra.mxu0 %v846
    %892 = vmatprep.subr.mxu0 0.0
    %893 = vmatpush1.msra.mxu0 %v845
    %894 = vmatprep.subr.mxu0 0.0
    %895 = vmatpush1.msra.mxu0 %v844
    %896 = vmatprep.subr.mxu0 0.0
    %897 = vmatpush1.msra.mxu0 %v843
    %898 = vmatprep.subr.mxu0 0.0
    %899 = vmatpush2.msra.mxu0 0.0
    %900 = vmatprep.subr.mxu0 0.0
    %901 = vmatpush2.msra.mxu0 0.0
    %902 = vmatprep.subr.mxu0 0.0
    %903 = vmatpush2.msra.mxu0 0.0
    %904 = vmatprep.subr.mxu0 0.0
    %905 = vmatpush2.msra.mxu0 0.0
    %906 = vmatprep.subr.mxu0 0.0
    %907 = vmatpush2.msra.mxu0 0.0
    %908 = vmatprep.subr.mxu0 0.0
    %909 = vmatpush2.msra.mxu0 0.0
    %910 = vmatprep.subr.mxu0 0.0
    %911 = vmatpush2.msra.mxu0 0.0
    %912 = vmatprep.subr.mxu0 0.0
    %913 = vmatpush2.msra.mxu0 0.0
    %914 = vmatprep.subr.mxu0 0.0
    %915 = vmatpush2.msra.mxu0 0.0
    %916 = vmatprep.subr.mxu0 0.0
    %917 = vmatpush2.msra.mxu0 0.0
    %918 = vmatprep.subr.mxu0 0.0
    %919 = vmatpush2.msra.mxu0 0.0
    %920 = vmatprep.subr.mxu0 0.0
    %921 = vmatpush2.msra.mxu0 0.0
    %922 = vmatprep.subr.mxu0 0.0
    %923 = vmatpush2.msra.mxu0 0.0
    %924 = vmatprep.subr.mxu0 0.0
    %925 = vmatpush2.msra.mxu0 0.0
    %926 = vmatprep.subr.mxu0 0.0
    %927 = vmatpush2.msra.mxu0 0.0
    %928 = vmatprep.subr.mxu0 0.0
    %929 = vmatpush2.msra.mxu0 0.0
    %930 = vmatprep.mubr.f32.mxu0 0.0
    %931 = vmatmul.mubr.f32.gmra.mxu0 %v842
    %v932 = vpop.f32.mrf.mxu0
    %v933 = vadd.f32 %v864, %v932
    %v934 = vpop.f32.mrf.mxu0
    %935 = vdwg.mxu0
    %936 = vst [vmem:[#allocation19] sm:$0xff] %v933
    // Predicated region
    $region106: #{tpu_custom_call.1} parent=1 // pred_check
      _
    $region107: #{tpu_custom_call.1} parent=1 // pred_check_branch
      %938 = sbr.rel (0) target = $region109
    $region108: #{tpu_custom_call.1} parent=1 // pred_region
      %s940 = ssub.s32 128, 128
      %941 = vsyncadd [#allocation4], %s940
      %s943 = sshll.u32 [#allocation19], 4
      %s944 = int_to_ptr.vmem [resolvable:$true] %s943
      %946 = dma.vmem_to_hbm [thread:$0]  %s944, 128, %s16, [#allocation4]
    $region109: #{tpu_custom_call.1} parent=1 // pred_fallthru
      _
    // Predicated region
    $region110: #{tpu_custom_call.1} parent=1 // pred_check
      _
    $region111: #{tpu_custom_call.1} parent=1 // pred_check_branch
      %948 = sbr.rel (0) target = $region113
    $region112: #{tpu_custom_call.1} parent=1 // pred_region
      %949 = dma.done [#allocation4], 128
    $region113: #{tpu_custom_call.1} parent=1 // pred_fallthru
      _
    %950 = vsyncpa [#allocation3], 1
    %951 = vsyncpa [#allocation6], 1
    %952 = vsyncpa [#allocation9], 1
    %953 = vsyncpa [#allocation12], 1
    %954 = vsyncpa [#allocation15], 1
    %955 = vsyncpa [#allocation18], 1
    %956 = vsyncpa [#allocation4], 1

</llo_original>
